<compile_context>
chip_gen: v7x
topology: tpu7x:2x2x1
jax: 0.10.0
libtpu: 0.0.40
codegen_flags: <defaults>
</compile_context>

<pallas_src>
import functools

import jax
import jax.numpy as jnp
from jax import lax
from jax.experimental import pallas as pl
from jax.experimental.pallas import tpu as pltpu


_LANE = 512                 # tk granularity (multiple of 128)
_TK_CAP = 1 << 17           # sanity cap on tile width
_EPS = 1e-12                # F.normalize default eps


def _cdiv(a, b):
    return -(-a // b)


def _round_up(x, m):
    return _cdiv(x, m) * m


def _vmem_capacity_bytes():
    """Per-core VMEM capacity; conservative fallback if the query fails."""
    try:
        return int(pltpu.get_tpu_info().vmem_capacity_bytes)
    except Exception:
        return 64 * 1024 * 1024        # v7x-sized (smallest current part)


def _num_tensorcores():
    """2 on v7x (split the feature axis across TCs), else 1 (v5e/v6e)."""
    try:
        kind = jax.devices()[0].device_kind.lower()
    except Exception:
        return 1
    return 2 if ("v7" in kind or "7x" in kind) else 1


def _pick_tk(B, itemsize_s, itemsize_t, d_max, budget):
    """Largest lane-aligned tile width whose double-buffered input tiles (plus
    headroom for one masked-edge copy) fit in `budget` bytes of VMEM."""
    per_col = 2 * B * (itemsize_s + itemsize_t) + B * max(itemsize_s, itemsize_t)
    tk = budget // max(per_col, 1)
    tk = min(tk, _TK_CAP)
    tk = min(tk, _round_up(d_max, _LANE))
    tk = max(_LANE, (tk // _LANE) * _LANE)
    return int(tk)


def _accum_gram(x_ref, acc_ref, *, col0, D, tk, mask_needed, skip_needed):
    """acc += X_tile @ X_tile.T with statically-minimal masking/skipping.

    * interior tiles: straight load -> MXU (no iota / select).
    * ragged edge tile (only if D % tk != 0): zero out-of-range columns in the
      source dtype via a (1, tk) iota broadcast (no full-tile int32 temp).
    * fully-clamped duplicate tiles: skip the matmul entirely.
    """
    dn = (((1,), (1,)), ((), ()))   # contract last dim with last dim == X @ X.T

    def _do(masked):
        x = x_ref[...]              # native dtype straight into the MXU
        if masked:
            col = col0 + lax.broadcasted_iota(jnp.int32, (1, x.shape[1]), 1)
            x = jnp.where(col < D, x, jnp.zeros((), dtype=x.dtype))
        acc_ref[...] += lax.dot_general(
            x, x, dn, preferred_element_type=jnp.float32)

    if not mask_needed and not skip_needed:
        _do(False)
        return

    @pl.when(col0 + tk <= D)                                  # interior tile
    def _():
        _do(False)

    if mask_needed:
        @pl.when(jnp.logical_and(col0 < D, col0 + tk > D))    # ragged edge
        def _():
            _do(True)
    # col0 >= D: clamped duplicate block -> no work (DMA is deduped by Pallas).


def _normalize_mse(gs, gt, inv_bb):
    eps = jnp.float32(_EPS)
    ns = jnp.sqrt(jnp.sum(gs * gs, axis=1, keepdims=True))
    nt = jnp.sqrt(jnp.sum(gt * gt, axis=1, keepdims=True))
    diff = gs / jnp.maximum(ns, eps) - gt / jnp.maximum(nt, eps)
    return jnp.sum(diff * diff) * jnp.float32(inv_bb)


def _sp_fused_kernel(s_ref, t_ref, out_ref, gs_acc, gt_acc, *,
                     tk, Ds, Dt, mask_s, mask_t, skip_s, skip_t, inv_bb):
    """Single-TensorCore path: Gram accumulation + finalize in one kernel."""
    k = pl.program_id(0)
    col0 = k * tk

    @pl.when(k == 0)
    def _():
        gs_acc[...] = jnp.zeros_like(gs_acc)
        gt_acc[...] = jnp.zeros_like(gt_acc)

    _accum_gram(s_ref, gs_acc, col0=col0, D=Ds, tk=tk,
                mask_needed=mask_s, skip_needed=skip_s)
    _accum_gram(t_ref, gt_acc, col0=col0, D=Dt, tk=tk,
                mask_needed=mask_t, skip_needed=skip_t)

    @pl.when(k == pl.num_programs(0) - 1)
    def _():
        out_ref[0, 0] = _normalize_mse(gs_acc[...], gt_acc[...], inv_bb)


def _sp_gram_kernel(s_ref, t_ref, gs_out, gt_out, *,
                    tk, n_blocks_per_core, Ds, Dt,
                    mask_s, mask_t, skip_s, skip_t):
    """2-TC path: accumulate this core's partial Grams directly into outputs."""
    c = pl.program_id(0)
    k = pl.program_id(1)
    col0 = (c * n_blocks_per_core + k) * tk

    @pl.when(k == 0)
    def _():
        gs_out[...] = jnp.zeros_like(gs_out)
        gt_out[...] = jnp.zeros_like(gt_out)

    _accum_gram(s_ref, gs_out, col0=col0, D=Ds, tk=tk,
                mask_needed=mask_s, skip_needed=skip_s)
    _accum_gram(t_ref, gt_out, col0=col0, D=Dt, tk=tk,
                mask_needed=mask_t, skip_needed=skip_t)


def _sp_finalize_kernel(gs_ref, gt_ref, out_ref, *, inv_bb):
    """Combine per-core partial Grams, row-normalize, reduce to MSE."""
    gs = jnp.sum(gs_ref[...], axis=0)
    gt = jnp.sum(gt_ref[...], axis=0)
    out_ref[0, 0] = _normalize_mse(gs, gt, inv_bb)


@jax.jit
def criterion_sp(fm_s, fm_t):
    """Pallas implementation of CriterionSP.forward. Inputs are NCHW."""
    B = fm_s.shape[0]
    assert fm_t.shape[0] == B, "batch dims must match"
    s2d = fm_s.reshape(B, -1)          # no padding / no dtype cast materialized
    t2d = fm_t.reshape(B, -1)
    Ds, Dt = s2d.shape[1], t2d.shape[1]
    d_max = max(Ds, Dt)

    # ---- per-generation VMEM / tiling budget --------------------------------
    vmem_cap = _vmem_capacity_bytes()                   # 64 MiB v7x, 128 MiB v5e/v6e
    vmem_limit = int(min(vmem_cap * 3 // 4, 112 * 1024 * 1024))
    fixed = 16 * B * B * 4 + (6 << 20)                  # acc/out buffers + Mosaic headroom
    tile_budget = max(vmem_limit - fixed, 4 << 20)
    tk = _pick_tk(B, s2d.dtype.itemsize, t2d.dtype.itemsize, d_max, tile_budget)

    n_valid_s = _cdiv(Ds, tk)
    n_valid_t = _cdiv(Dt, tk)
    n_blocks = max(n_valid_s, n_valid_t)
    last_s = n_valid_s - 1
    last_t = n_valid_t - 1

    ncores = _num_tensorcores() if n_blocks >= 2 else 1
    n_blocks_per_core = _cdiv(n_blocks, ncores)
    total_blocks = ncores * n_blocks_per_core

    mask_s = (Ds % tk) != 0
    mask_t = (Dt % tk) != 0
    skip_s = total_blocks > n_valid_s
    skip_t = total_blocks > n_valid_t
    inv_bb = 1.0 / float(B * B)

    bytes_in = B * (Ds * s2d.dtype.itemsize + Dt * t2d.dtype.itemsize)
    flops = 2 * B * B * (Ds + Dt)

    if ncores == 1:
        # Single TensorCore (v5e / v6e): one fused kernel, scalar SMEM output.
        kernel = functools.partial(
            _sp_fused_kernel, tk=tk, Ds=Ds, Dt=Dt,
            mask_s=mask_s, mask_t=mask_t, skip_s=skip_s, skip_t=skip_t,
            inv_bb=inv_bb)

        loss = pl.pallas_call(
            kernel,
            out_shape=jax.ShapeDtypeStruct((1, 1), jnp.float32),
            grid_spec=pltpu.PrefetchScalarGridSpec(
                num_scalar_prefetch=0,
                grid=(total_blocks,),
                in_specs=[
                    pl.BlockSpec((B, tk), lambda k: (0, jnp.minimum(k, last_s))),
                    pl.BlockSpec((B, tk), lambda k: (0, jnp.minimum(k, last_t))),
                ],
                out_specs=pl.BlockSpec(memory_space=pltpu.MemorySpace.SMEM),
                scratch_shapes=[
                    pltpu.VMEM((B, B), jnp.float32),
                    pltpu.VMEM((B, B), jnp.float32),
                ],
            ),
            compiler_params=pltpu.CompilerParams(
                dimension_semantics=("arbitrary",),
                vmem_limit_bytes=vmem_limit,
            ),
            cost_estimate=pl.CostEstimate(
                flops=flops + 10 * B * B, transcendentals=2 * B,
                bytes_accessed=bytes_in + 4),
        )(s2d, t2d)
        return loss[0, 0]

    # Two TensorCores (v7x): split the feature axis across cores; each core
    # accumulates a partial (B, B) Gram pair directly into its output block
    # (VMEM-resident across the k axis — no scratch copy), then a tiny
    # epilogue combines + normalizes + reduces to the scalar MSE.
    kernel = functools.partial(
        _sp_gram_kernel, tk=tk, n_blocks_per_core=n_blocks_per_core,
        Ds=Ds, Dt=Dt, mask_s=mask_s, mask_t=mask_t,
        skip_s=skip_s, skip_t=skip_t)

    def s_map(c, k):
        return (0, jnp.minimum(c * n_blocks_per_core + k, last_s))

    def t_map(c, k):
        return (0, jnp.minimum(c * n_blocks_per_core + k, last_t))

    gs_parts, gt_parts = pl.pallas_call(
        kernel,
        out_shape=(jax.ShapeDtypeStruct((ncores, B, B), jnp.float32),
                   jax.ShapeDtypeStruct((ncores, B, B), jnp.float32)),
        grid_spec=pltpu.PrefetchScalarGridSpec(
            num_scalar_prefetch=0,
            grid=(ncores, n_blocks_per_core),
            in_specs=[
                pl.BlockSpec((B, tk), s_map),
                pl.BlockSpec((B, tk), t_map),
            ],
            out_specs=[
                pl.BlockSpec((None, B, B), lambda c, k: (c, 0, 0)),
                pl.BlockSpec((None, B, B), lambda c, k: (c, 0, 0)),
            ],
        ),
        compiler_params=pltpu.CompilerParams(
            # "parallel" on the leading axis is the documented megacore split;
            # TODO(synk): switch to pltpu.CORE_PARALLEL if a v7x trace shows
            # only one TensorCore active.
            dimension_semantics=("parallel", "arbitrary"),
            vmem_limit_bytes=vmem_limit,
        ),
        cost_estimate=pl.CostEstimate(
            flops=flops, transcendentals=0,
            bytes_accessed=bytes_in + 2 * ncores * B * B * 4),
    )(s2d, t2d)

    loss = pl.pallas_call(
        functools.partial(_sp_finalize_kernel, inv_bb=inv_bb),
        out_shape=jax.ShapeDtypeStruct((1, 1), jnp.float32),
        in_specs=[
            pl.BlockSpec(memory_space=pltpu.MemorySpace.VMEM),
            pl.BlockSpec(memory_space=pltpu.MemorySpace.VMEM),
        ],
        out_specs=pl.BlockSpec(memory_space=pltpu.MemorySpace.SMEM),
        cost_estimate=pl.CostEstimate(
            flops=10 * ncores * B * B, transcendentals=2 * B,
            bytes_accessed=2 * ncores * B * B * 4 + 4),
    )(gs_parts, gt_parts)
    return loss[0, 0]


def _criterion_sp_ref(fm_s, fm_t):
    """Pure-JAX reference matching the PyTorch module."""
    B = fm_s.shape[0]
    s = fm_s.reshape(B, -1).astype(jnp.float32)
    t = fm_t.reshape(B, -1).astype(jnp.float32)
    gs = s @ s.T
    gt = t @ t.T
    eps = 1e-12
    gs_n = gs / jnp.maximum(jnp.linalg.norm(gs, axis=1, keepdims=True), eps)
    gt_n = gt / jnp.maximum(jnp.linalg.norm(gt, axis=1, keepdims=True), eps)
    return jnp.mean((gs_n - gt_n) ** 2)


if __name__ == "__main__":
    key = jax.random.PRNGKey(0)
    k_s, k_t = jax.random.split(key)
    # Student / teacher feature maps, NCHW.
    fm_s = jax.random.normal(k_s, (2, 4, 16, 16), dtype=jnp.float32)
    fm_t = jax.random.normal(k_t, (2, 4, 16, 16), dtype=jnp.float32)

    loss = criterion_sp(fm_s, fm_t)
    jax.block_until_ready(loss)

    ref = _criterion_sp_ref(fm_s, fm_t)
    assert jnp.allclose(loss, ref, rtol=1e-5, atol=1e-6), (loss, ref)
    print("KERNEL_OK")
</pallas_src>

<mosaic_0001>
module attributes {stable_mosaic.version = 11 : i64} {
  func.func @_sp_fused_kernel(%arg0: i32, %arg1: memref<2x1024xf32, #tpu.memory_space<vmem>>, %arg2: memref<2x1024xf32, #tpu.memory_space<vmem>>, %arg3: memref<1x1xf32, #tpu.memory_space<smem>>, %arg4: memref<2x2xf32, #tpu.memory_space<vmem>>, %arg5: memref<2x2xf32, #tpu.memory_space<vmem>>) attributes {dimension_semantics = [#tpu.dimension_semantics<arbitrary>], iteration_bounds = array<i64: 1>, scalar_prefetch = 0 : i64, scratch_operands = 2 : i64, tpu.core_type = #tpu.core_type<tc>, window_params = [{transform_indices = @transform_0, window_bounds = array<i64: 2, 1024>}, {transform_indices = @transform_1, window_bounds = array<i64: 2, 1024>}, {transform_indices = @transform_2, window_bounds = array<i64: 1, 1>}]} {
    %c0_i32 = arith.constant 0 : i32
    %0 = arith.cmpi eq, %arg0, %c0_i32 : i32
    %1 = arith.extui %0 : i1 to i32
    %c0_i32_0 = arith.constant 0 : i32
    %2 = arith.cmpi ne, %1, %c0_i32_0 : i32
    scf.if %2 {
      %cst_15 = arith.constant 0.000000e+00 : f32
      %16 = vector.broadcast %cst_15 : f32 to vector<2x2xf32>
      %c0_16 = arith.constant 0 : index
      %c0_17 = arith.constant 0 : index
      %17 = vector.load %arg4[%c0_16, %c0_17] : memref<2x2xf32, #tpu.memory_space<vmem>>, vector<2x2xf32>
      tpu.vector_store %arg4[%c0_16, %c0_17], %16 {strides = array<i32>} : memref<2x2xf32, #tpu.memory_space<vmem>>, vector<2x2xf32>,
      %cst_18 = arith.constant 0.000000e+00 : f32
      %18 = vector.broadcast %cst_18 : f32 to vector<2x2xf32>
      %c0_19 = arith.constant 0 : index
      %c0_20 = arith.constant 0 : index
      %19 = vector.load %arg5[%c0_19, %c0_20] : memref<2x2xf32, #tpu.memory_space<vmem>>, vector<2x2xf32>
      tpu.vector_store %arg5[%c0_19, %c0_20], %18 {strides = array<i32>} : memref<2x2xf32, #tpu.memory_space<vmem>>, vector<2x2xf32>,
    } else {
    }
    %c0 = arith.constant 0 : index
    %c0_1 = arith.constant 0 : index
    %3 = vector.load %arg1[%c0, %c0_1] : memref<2x1024xf32, #tpu.memory_space<vmem>>, vector<2x1024xf32>
    %c0_2 = arith.constant 0 : index
    %c0_3 = arith.constant 0 : index
    %4 = vector.load %arg4[%c0_2, %c0_3] : memref<2x2xf32, #tpu.memory_space<vmem>>, vector<2x2xf32>
    %cst = arith.constant dense<0.000000e+00> : vector<2x2xf32>
    %5 = tpu.matmul %3, %3, %cst {dimension_numbers = #tpu.dot_dimension_numbers<[1], [1], [0], [0], [0, 0, 1, 0], [], []>} : vector<2x1024xf32>, vector<2x1024xf32>, vector<2x2xf32> -> vector<2x2xf32>
    %6 = arith.addf %4, %5 : vector<2x2xf32>
    %c0_4 = arith.constant 0 : index
    %c0_5 = arith.constant 0 : index
    %7 = vector.load %arg4[%c0_4, %c0_5] : memref<2x2xf32, #tpu.memory_space<vmem>>, vector<2x2xf32>
    tpu.vector_store %arg4[%c0_4, %c0_5], %6 {strides = array<i32>} : memref<2x2xf32, #tpu.memory_space<vmem>>, vector<2x2xf32>,
    %c0_6 = arith.constant 0 : index
    %c0_7 = arith.constant 0 : index
    %8 = vector.load %arg2[%c0_6, %c0_7] : memref<2x1024xf32, #tpu.memory_space<vmem>>, vector<2x1024xf32>
    %c0_8 = arith.constant 0 : index
    %c0_9 = arith.constant 0 : index
    %9 = vector.load %arg5[%c0_8, %c0_9] : memref<2x2xf32, #tpu.memory_space<vmem>>, vector<2x2xf32>
    %cst_10 = arith.constant dense<0.000000e+00> : vector<2x2xf32>
    %10 = tpu.matmul %8, %8, %cst_10 {dimension_numbers = #tpu.dot_dimension_numbers<[1], [1], [0], [0], [0, 0, 1, 0], [], []>} : vector<2x1024xf32>, vector<2x1024xf32>, vector<2x2xf32> -> vector<2x2xf32>
    %11 = arith.addf %9, %10 : vector<2x2xf32>
    %c0_11 = arith.constant 0 : index
    %c0_12 = arith.constant 0 : index
    %12 = vector.load %arg5[%c0_11, %c0_12] : memref<2x2xf32, #tpu.memory_space<vmem>>, vector<2x2xf32>
    tpu.vector_store %arg5[%c0_11, %c0_12], %11 {strides = array<i32>} : memref<2x2xf32, #tpu.memory_space<vmem>>, vector<2x2xf32>,
    %c0_i32_13 = arith.constant 0 : i32
    %13 = arith.cmpi eq, %arg0, %c0_i32_13 : i32
    %14 = arith.extui %13 : i1 to i32
    %c0_i32_14 = arith.constant 0 : i32
    %15 = arith.cmpi ne, %14, %c0_i32_14 : i32
    scf.if %15 {
      %c0_15 = arith.constant 0 : index
      %c0_16 = arith.constant 0 : index
      %16 = vector.load %arg4[%c0_15, %c0_16] : memref<2x2xf32, #tpu.memory_space<vmem>>, vector<2x2xf32>
      %c0_17 = arith.constant 0 : index
      %c0_18 = arith.constant 0 : index
      %17 = vector.load %arg5[%c0_17, %c0_18] : memref<2x2xf32, #tpu.memory_space<vmem>>, vector<2x2xf32>
      %18 = arith.mulf %16, %16 : vector<2x2xf32>
      %cst_19 = arith.constant dense<0.000000e+00> : vector<2xf32>
      %19 = vector.multi_reduction <add>, %18, %cst_19 [1] : vector<2x2xf32> to vector<2xf32>
      %20 = vector.shape_cast %19 : vector<2xf32> to vector<2x1xf32>
      %21 = math.sqrt %20 : vector<2x1xf32>
      %22 = arith.mulf %17, %17 : vector<2x2xf32>
      %cst_20 = arith.constant dense<0.000000e+00> : vector<2xf32>
      %23 = vector.multi_reduction <add>, %22, %cst_20 [1] : vector<2x2xf32> to vector<2xf32>
      %24 = vector.shape_cast %23 : vector<2xf32> to vector<2x1xf32>
      %25 = math.sqrt %24 : vector<2x1xf32>
      %cst_21 = arith.constant 9.99999996E-13 : f32
      %26 = vector.broadcast %cst_21 : f32 to vector<2x1xf32>
      %27 = arith.maximumf %21, %26 : vector<2x1xf32>
      %28 = vector.broadcast %27 : vector<2x1xf32> to vector<2x2xf32>
      %29 = arith.divf %16, %28 : vector<2x2xf32>
      %cst_22 = arith.constant 9.99999996E-13 : f32
      %30 = vector.broadcast %cst_22 : f32 to vector<2x1xf32>
      %31 = arith.maximumf %25, %30 : vector<2x1xf32>
      %32 = vector.broadcast %31 : vector<2x1xf32> to vector<2x2xf32>
      %33 = arith.divf %17, %32 : vector<2x2xf32>
      %34 = arith.subf %29, %33 : vector<2x2xf32>
      %35 = arith.mulf %34, %34 : vector<2x2xf32>
      %36 = vector.shape_cast %35 : vector<2x2xf32> to vector<1x2x2xf32>
      %cst_23 = arith.constant dense<0.000000e+00> : vector<1xf32>
      %37 = vector.multi_reduction <add>, %36, %cst_23 [1, 2] : vector<1x2x2xf32> to vector<1xf32>
      %38 = vector.shape_cast %37 : vector<1xf32> to vector<1x1x1xf32>
      %39 = vector.extract %38[0, 0, 0] : f32 from vector<1x1x1xf32>
      %cst_24 = arith.constant 2.500000e-01 : f32
      %40 = arith.mulf %39, %cst_24 : f32
      %c0_25 = arith.constant 0 : index
      %c0_26 = arith.constant 0 : index
      %41 = memref.load %arg3[%c0_25, %c0_26] : memref<1x1xf32, #tpu.memory_space<smem>>
      memref.store %40, %arg3[%c0_25, %c0_26] : memref<1x1xf32, #tpu.memory_space<smem>>
    } else {
    }
    return
  }
  func.func @transform_0(%arg0: i32) -> (i32, i32) {
    %c0_i32 = arith.constant 0 : i32
    %0 = arith.minsi %arg0, %c0_i32 : i32
    %c0_i32_0 = arith.constant 0 : i32
    %c0_i32_1 = arith.constant 0 : i32
    return %c0_i32_0, %0 : i32, i32
  }
  func.func @transform_1(%arg0: i32) -> (i32, i32) {
    %c0_i32 = arith.constant 0 : i32
    %0 = arith.minsi %arg0, %c0_i32 : i32
    %c0_i32_0 = arith.constant 0 : i32
    %c0_i32_1 = arith.constant 0 : i32
    return %c0_i32_0, %0 : i32, i32
  }
  func.func @transform_2(%arg0: i32) -> (i32, i32) {
    %c0_i32 = arith.constant 0 : i32
    %c0_i32_0 = arith.constant 0 : i32
    %c0_i32_1 = arith.constant 0 : i32
    return %c0_i32, %c0_i32_0 : i32, i32
  }
}

</mosaic_0001>

<llo_original>
// kernel: criterion_sp.1
$region0: #{criterion_sp.1}
  #allocation0 [shape = 'u32[]', space=smem, size = 0x4, offset = 0x4, fixed_abs, tag = 'smem constant byte address 0x4 - core index']
  #allocation1 [shape = 'u32[144,128]{1,0:T(1,128)}', space=vmem, size = 0x12000, scoped, tag = 'internal scratch']
  #allocation2 [shape = 'f32[2,2]{1,0:T(2,128)}', space=vmem, size = 0x400, scoped, tag = 'scratch operand']
  #allocation3 [shape = 'f32[2,2]{1,0:T(2,128)}', space=vmem, size = 0x400, scoped, tag = 'scratch operand']
  %s0 = inlined_call_operand.vmem [shape: f32[2,1024], index: 0, kind: input, shape index: {}]
  %s1 = inlined_call_operand.vmem [shape: f32[2,1024], index: 1, kind: input, shape index: {}]
  %s2 = inlined_call_operand.hbm [shape: f32[1,1], index: 2, kind: output, shape index: {}]
  %s3 = sld [smem:[#allocation0]]
  $region26: #{criterion_sp.1} parent=0
    _
  %s5 = ssub.s32 1, %s3
  %s6 = scalar_select 0, %s5, %s3
  $region1: #{criterion_sp.1} parent=0
    #allocation4 [shape = 'u8[512]{0}', space=smem, size = 0x200, scoped, tag = 'output window, operand 0, single buffered']
    #allocation5 [shape = 's32[1]{0}', space=sflag, size = 0x4, scoped, tag = 'scoped memory for criterion_sp.1']
    %7 = vsyncpa [#allocation5], 0
    // Predicated region
    $region2: #{criterion_sp.1} parent=1 // pred_check
      _
    $region3: #{criterion_sp.1} parent=1 // pred_check_branch
      %9 = sbr.rel (0) target = $region5
    $region4: #{criterion_sp.1} parent=1 // pred_region
      _
    $region5: #{criterion_sp.1} parent=1 // pred_fallthru
      _
    // Predicated region
    $region6: #{criterion_sp.1} parent=1 // pred_check
      _
    $region7: #{criterion_sp.1} parent=1 // pred_check_branch
      %11 = sbr.rel (0) target = $region9
    $region8: #{criterion_sp.1} parent=1 // pred_region
      _
    $region9: #{criterion_sp.1} parent=1 // pred_fallthru
      _
    %p12 = scmp.eq.s32.totalorder 0, 0
    // Predicated region
    $region10: #{criterion_sp.1} parent=1 // pred_check
      %p13 = pneg %p12
    $region11: #{criterion_sp.1} parent=1 // pred_check_branch
      %15 = sbr.rel (%p13) target = $region13
    $region12: #{criterion_sp.1} parent=1 // pred_region
      %vm16 = vcmask 9216
      %17 = vst.msk [vmem:[#allocation2] sm:$0x3] %vm16, 0.0
      %18 = vst.msk [vmem:[#allocation3] sm:$0x3] %vm16, 0.0
    $region13: #{criterion_sp.1} parent=1 // pred_fallthru
      _
    %v19 = vld [vmem:[%s0] sm:$0xff]
    %v20 = vld [vmem:[%s0 + $0x8] sm:$0xff]
    %v21 = vld [vmem:[#allocation2] sm:$0x3]
    %v24 = vcombine.high %v19, %v19
    %v26 = vunpack.c.l.s4 1983009808
    %v27 = vunpack.c.0.s8 %v26
    %v28 = vlaneseq
    %v29 = vshrl.u32 %v28, 7
    %v30 = vsub.s32 %v27, %v29
    %v31 = vrot.slane %v19, %v30
    %v33 = vunpack.c.l.s4 1983009808
    %v34 = vunpack.c.0.s8 %v33
    %v35 = vlaneseq
    %v36 = vshrl.u32 %v35, 7
    %v37 = vsub.s32 %v34, %v36
    %v38 = vrot.slane %v24, %v37
    %v39 = vcombine.high %v31, %v31
    %v40 = vcombine.high %v38, %v38
    %v41 = vcombine.high %v20, %v20
    %v43 = vunpack.c.l.s4 1983009808
    %v44 = vunpack.c.0.s8 %v43
    %v45 = vlaneseq
    %v46 = vshrl.u32 %v45, 7
    %v47 = vsub.s32 %v44, %v46
    %v48 = vrot.slane %v20, %v47
    %v50 = vunpack.c.l.s4 1983009808
    %v51 = vunpack.c.0.s8 %v50
    %v52 = vlaneseq
    %v53 = vshrl.u32 %v52, 7
    %v54 = vsub.s32 %v51, %v53
    %v55 = vrot.slane %v41, %v54
    %v56 = vcombine.high %v48, %v48
    %v57 = vcombine.high %v55, %v55
    %66 = vmatprep.subr.mxu0 %v39
    %67 = vmatpush1.xpose.msra.mxu0 %v31
    %68 = vmatprep.subr.mxu0 0.0
    %69 = vmatpush1.xpose.msra.mxu0 0.0
    %70 = vmatprep.subr.mxu0 0.0
    %71 = vmatpush1.xpose.msra.mxu0 0.0
    %72 = vmatprep.subr.mxu0 0.0
    %73 = vmatpush1.xpose.msra.mxu0 0.0
    %74 = vmatprep.subr.mxu0 0.0
    %75 = vmatpush1.xpose.msra.mxu0 0.0
    %76 = vmatprep.subr.mxu0 0.0
    %77 = vmatpush1.xpose.msra.mxu0 0.0
    %78 = vmatprep.subr.mxu0 0.0
    %79 = vmatpush1.xpose.msra.mxu0 0.0
    %80 = vmatprep.subr.mxu0 0.0
    %81 = vmatpush1.xpose.msra.mxu0 0.0
    %82 = vmatprep.subr.mxu0 0.0
    %83 = vmatpush1.xpose.msra.mxu0 0.0
    %84 = vmatprep.subr.mxu0 0.0
    %85 = vmatpush1.xpose.msra.mxu0 0.0
    %86 = vmatprep.subr.mxu0 0.0
    %87 = vmatpush1.xpose.msra.mxu0 0.0
    %88 = vmatprep.subr.mxu0 0.0
    %89 = vmatpush1.xpose.msra.mxu0 0.0
    %90 = vmatprep.subr.mxu0 0.0
    %91 = vmatpush1.xpose.msra.mxu0 0.0
    %92 = vmatprep.subr.mxu0 0.0
    %93 = vmatpush1.xpose.msra.mxu0 0.0
    %94 = vmatprep.subr.mxu0 0.0
    %95 = vmatpush1.xpose.msra.mxu0 0.0
    %96 = vmatprep.subr.mxu0 0.0
    %97 = vmatpush1.xpose.msra.mxu0 0.0
    %98 = vmatprep.subr.mxu0 0.0
    %99 = vmatpush1.xpose.msra.mxu0 0.0
    %100 = vmatprep.subr.mxu0 0.0
    %101 = vmatpush1.xpose.msra.mxu0 0.0
    %102 = vmatprep.subr.mxu0 0.0
    %103 = vmatpush1.xpose.msra.mxu0 0.0
    %104 = vmatprep.subr.mxu0 0.0
    %105 = vmatpush1.xpose.msra.mxu0 0.0
    %106 = vmatprep.subr.mxu0 0.0
    %107 = vmatpush1.xpose.msra.mxu0 0.0
    %108 = vmatprep.subr.mxu0 0.0
    %109 = vmatpush1.xpose.msra.mxu0 0.0
    %110 = vmatprep.subr.mxu0 0.0
    %111 = vmatpush1.xpose.msra.mxu0 0.0
    %112 = vmatprep.subr.mxu0 0.0
    %113 = vmatpush1.xpose.msra.mxu0 0.0
    %114 = vmatprep.subr.mxu0 0.0
    %115 = vmatpush1.xpose.msra.mxu0 0.0
    %116 = vmatprep.subr.mxu0 0.0
    %117 = vmatpush1.xpose.msra.mxu0 0.0
    %118 = vmatprep.subr.mxu0 0.0
    %119 = vmatpush1.xpose.msra.mxu0 0.0
    %120 = vmatprep.subr.mxu0 0.0
    %121 = vmatpush1.xpose.msra.mxu0 0.0
    %122 = vmatprep.subr.mxu0 0.0
    %123 = vmatpush1.xpose.msra.mxu0 0.0
    %124 = vmatprep.subr.mxu0 0.0
    %125 = vmatpush1.xpose.msra.mxu0 0.0
    %126 = vmatprep.subr.mxu0 0.0
    %127 = vmatpush1.xpose.msra.mxu0 0.0
    %128 = vmatprep.subr.mxu0 0.0
    %129 = vmatpush1.xpose.msra.mxu0 0.0
    %130 = vmatprep.mubr.f32.mxu0 %v39
    %131 = vmatmul.mubr.f32.gmra.mrb[0].mxu0 %v31
    %v132 = vpop.f32.mrb[0].mxu0
    %v133 = vadd.f32 0.0, %v132
    %v134 = vpop.f32.mrb[0].mxu0
    %135 = vdwg.mxu0
    %136 = vmatprep.subr.mxu0 %v40
    %137 = vmatpush1.xpose.msra.mxu0 %v38
    %138 = vmatprep.subr.mxu0 0.0
    %139 = vmatpush1.xpose.msra.mxu0 0.0
    %140 = vmatprep.subr.mxu0 0.0
    %141 = vmatpush1.xpose.msra.mxu0 0.0
    %142 = vmatprep.subr.mxu0 0.0
    %143 = vmatpush1.xpose.msra.mxu0 0.0
    %144 = vmatprep.subr.mxu0 0.0
    %145 = vmatpush1.xpose.msra.mxu0 0.0
    %146 = vmatprep.subr.mxu0 0.0
    %147 = vmatpush1.xpose.msra.mxu0 0.0
    %148 = vmatprep.subr.mxu0 0.0
    %149 = vmatpush1.xpose.msra.mxu0 0.0
    %150 = vmatprep.subr.mxu0 0.0
    %151 = vmatpush1.xpose.msra.mxu0 0.0
    %152 = vmatprep.subr.mxu0 0.0
    %153 = vmatpush1.xpose.msra.mxu0 0.0
    %154 = vmatprep.subr.mxu0 0.0
    %155 = vmatpush1.xpose.msra.mxu0 0.0
    %156 = vmatprep.subr.mxu0 0.0
    %157 = vmatpush1.xpose.msra.mxu0 0.0
    %158 = vmatprep.subr.mxu0 0.0
    %159 = vmatpush1.xpose.msra.mxu0 0.0
    %160 = vmatprep.subr.mxu0 0.0
    %161 = vmatpush1.xpose.msra.mxu0 0.0
    %162 = vmatprep.subr.mxu0 0.0
    %163 = vmatpush1.xpose.msra.mxu0 0.0
    %164 = vmatprep.subr.mxu0 0.0
    %165 = vmatpush1.xpose.msra.mxu0 0.0
    %166 = vmatprep.subr.mxu0 0.0
    %167 = vmatpush1.xpose.msra.mxu0 0.0
    %168 = vmatprep.subr.mxu0 0.0
    %169 = vmatpush1.xpose.msra.mxu0 0.0
    %170 = vmatprep.subr.mxu0 0.0
    %171 = vmatpush1.xpose.msra.mxu0 0.0
    %172 = vmatprep.subr.mxu0 0.0
    %173 = vmatpush1.xpose.msra.mxu0 0.0
    %174 = vmatprep.subr.mxu0 0.0
    %175 = vmatpush1.xpose.msra.mxu0 0.0
    %176 = vmatprep.subr.mxu0 0.0
    %177 = vmatpush1.xpose.msra.mxu0 0.0
    %178 = vmatprep.subr.mxu0 0.0
    %179 = vmatpush1.xpose.msra.mxu0 0.0
    %180 = vmatprep.subr.mxu0 0.0
    %181 = vmatpush1.xpose.msra.mxu0 0.0
    %182 = vmatprep.subr.mxu0 0.0
    %183 = vmatpush1.xpose.msra.mxu0 0.0
    %184 = vmatprep.subr.mxu0 0.0
    %185 = vmatpush1.xpose.msra.mxu0 0.0
    %186 = vmatprep.subr.mxu0 0.0
    %187 = vmatpush1.xpose.msra.mxu0 0.0
    %188 = vmatprep.subr.mxu0 0.0
    %189 = vmatpush1.xpose.msra.mxu0 0.0
    %190 = vmatprep.subr.mxu0 0.0
    %191 = vmatpush1.xpose.msra.mxu0 0.0
    %192 = vmatprep.subr.mxu0 0.0
    %193 = vmatpush1.xpose.msra.mxu0 0.0
    %194 = vmatprep.subr.mxu0 0.0
    %195 = vmatpush1.xpose.msra.mxu0 0.0
    %196 = vmatprep.subr.mxu0 0.0
    %197 = vmatpush1.xpose.msra.mxu0 0.0
    %198 = vmatprep.subr.mxu0 0.0
    %199 = vmatpush1.xpose.msra.mxu0 0.0
    %200 = vmatprep.mubr.f32.mxu0 %v40
    %201 = vmatmul.mubr.f32.gmra.mrb[0].mxu0 %v38
    %v202 = vpop.f32.mrb[0].mxu0
    %v203 = vadd.f32 %v133, %v202
    %v204 = vpop.f32.mrb[0].mxu0
    %205 = vdwg.mxu0
    %206 = vmatprep.subr.mxu0 %v56
    %207 = vmatpush1.xpose.msra.mxu0 %v48
    %208 = vmatprep.subr.mxu0 0.0
    %209 = vmatpush1.xpose.msra.mxu0 0.0
    %210 = vmatprep.subr.mxu0 0.0
    %211 = vmatpush1.xpose.msra.mxu0 0.0
    %212 = vmatprep.subr.mxu0 0.0
    %213 = vmatpush1.xpose.msra.mxu0 0.0
    %214 = vmatprep.subr.mxu0 0.0
    %215 = vmatpush1.xpose.msra.mxu0 0.0
    %216 = vmatprep.subr.mxu0 0.0
    %217 = vmatpush1.xpose.msra.mxu0 0.0
    %218 = vmatprep.subr.mxu0 0.0
    %219 = vmatpush1.xpose.msra.mxu0 0.0
    %220 = vmatprep.subr.mxu0 0.0
    %221 = vmatpush1.xpose.msra.mxu0 0.0
    %222 = vmatprep.subr.mxu0 0.0
    %223 = vmatpush1.xpose.msra.mxu0 0.0
    %224 = vmatprep.subr.mxu0 0.0
    %225 = vmatpush1.xpose.msra.mxu0 0.0
    %226 = vmatprep.subr.mxu0 0.0
    %227 = vmatpush1.xpose.msra.mxu0 0.0
    %228 = vmatprep.subr.mxu0 0.0
    %229 = vmatpush1.xpose.msra.mxu0 0.0
    %230 = vmatprep.subr.mxu0 0.0
    %231 = vmatpush1.xpose.msra.mxu0 0.0
    %232 = vmatprep.subr.mxu0 0.0
    %233 = vmatpush1.xpose.msra.mxu0 0.0
    %234 = vmatprep.subr.mxu0 0.0
    %235 = vmatpush1.xpose.msra.mxu0 0.0
    %236 = vmatprep.subr.mxu0 0.0
    %237 = vmatpush1.xpose.msra.mxu0 0.0
    %238 = vmatprep.subr.mxu0 0.0
    %239 = vmatpush1.xpose.msra.mxu0 0.0
    %240 = vmatprep.subr.mxu0 0.0
    %241 = vmatpush1.xpose.msra.mxu0 0.0
    %242 = vmatprep.subr.mxu0 0.0
    %243 = vmatpush1.xpose.msra.mxu0 0.0
    %244 = vmatprep.subr.mxu0 0.0
    %245 = vmatpush1.xpose.msra.mxu0 0.0
    %246 = vmatprep.subr.mxu0 0.0
    %247 = vmatpush1.xpose.msra.mxu0 0.0
    %248 = vmatprep.subr.mxu0 0.0
    %249 = vmatpush1.xpose.msra.mxu0 0.0
    %250 = vmatprep.subr.mxu0 0.0
    %251 = vmatpush1.xpose.msra.mxu0 0.0
    %252 = vmatprep.subr.mxu0 0.0
    %253 = vmatpush1.xpose.msra.mxu0 0.0
    %254 = vmatprep.subr.mxu0 0.0
    %255 = vmatpush1.xpose.msra.mxu0 0.0
    %256 = vmatprep.subr.mxu0 0.0
    %257 = vmatpush1.xpose.msra.mxu0 0.0
    %258 = vmatprep.subr.mxu0 0.0
    %259 = vmatpush1.xpose.msra.mxu0 0.0
    %260 = vmatprep.subr.mxu0 0.0
    %261 = vmatpush1.xpose.msra.mxu0 0.0
    %262 = vmatprep.subr.mxu0 0.0
    %263 = vmatpush1.xpose.msra.mxu0 0.0
    %264 = vmatprep.subr.mxu0 0.0
    %265 = vmatpush1.xpose.msra.mxu0 0.0
    %266 = vmatprep.subr.mxu0 0.0
    %267 = vmatpush1.xpose.msra.mxu0 0.0
    %268 = vmatprep.subr.mxu0 0.0
    %269 = vmatpush1.xpose.msra.mxu0 0.0
    %270 = vmatprep.mubr.f32.mxu0 %v56
    %271 = vmatmul.mubr.f32.gmra.mrb[0].mxu0 %v48
    %v272 = vpop.f32.mrb[0].mxu0
    %v273 = vadd.f32 %v203, %v272
    %v274 = vpop.f32.mrb[0].mxu0
    %275 = vdwg.mxu0
    %276 = vmatprep.subr.mxu0 %v57
    %277 = vmatpush1.xpose.msra.mxu0 %v55
    %278 = vmatprep.subr.mxu0 0.0
    %279 = vmatpush1.xpose.msra.mxu0 0.0
    %280 = vmatprep.subr.mxu0 0.0
    %281 = vmatpush1.xpose.msra.mxu0 0.0
    %282 = vmatprep.subr.mxu0 0.0
    %283 = vmatpush1.xpose.msra.mxu0 0.0
    %284 = vmatprep.subr.mxu0 0.0
    %285 = vmatpush1.xpose.msra.mxu0 0.0
    %286 = vmatprep.subr.mxu0 0.0
    %287 = vmatpush1.xpose.msra.mxu0 0.0
    %288 = vmatprep.subr.mxu0 0.0
    %289 = vmatpush1.xpose.msra.mxu0 0.0
    %290 = vmatprep.subr.mxu0 0.0
    %291 = vmatpush1.xpose.msra.mxu0 0.0
    %292 = vmatprep.subr.mxu0 0.0
    %293 = vmatpush1.xpose.msra.mxu0 0.0
    %294 = vmatprep.subr.mxu0 0.0
    %295 = vmatpush1.xpose.msra.mxu0 0.0
    %296 = vmatprep.subr.mxu0 0.0
    %297 = vmatpush1.xpose.msra.mxu0 0.0
    %298 = vmatprep.subr.mxu0 0.0
    %299 = vmatpush1.xpose.msra.mxu0 0.0
    %300 = vmatprep.subr.mxu0 0.0
    %301 = vmatpush1.xpose.msra.mxu0 0.0
    %302 = vmatprep.subr.mxu0 0.0
    %303 = vmatpush1.xpose.msra.mxu0 0.0
    %304 = vmatprep.subr.mxu0 0.0
    %305 = vmatpush1.xpose.msra.mxu0 0.0
    %306 = vmatprep.subr.mxu0 0.0
    %307 = vmatpush1.xpose.msra.mxu0 0.0
    %308 = vmatprep.subr.mxu0 0.0
    %309 = vmatpush1.xpose.msra.mxu0 0.0
    %310 = vmatprep.subr.mxu0 0.0
    %311 = vmatpush1.xpose.msra.mxu0 0.0
    %312 = vmatprep.subr.mxu0 0.0
    %313 = vmatpush1.xpose.msra.mxu0 0.0
    %314 = vmatprep.subr.mxu0 0.0
    %315 = vmatpush1.xpose.msra.mxu0 0.0
    %316 = vmatprep.subr.mxu0 0.0
    %317 = vmatpush1.xpose.msra.mxu0 0.0
    %318 = vmatprep.subr.mxu0 0.0
    %319 = vmatpush1.xpose.msra.mxu0 0.0
    %320 = vmatprep.subr.mxu0 0.0
    %321 = vmatpush1.xpose.msra.mxu0 0.0
    %322 = vmatprep.subr.mxu0 0.0
    %323 = vmatpush1.xpose.msra.mxu0 0.0
    %324 = vmatprep.subr.mxu0 0.0
    %325 = vmatpush1.xpose.msra.mxu0 0.0
    %326 = vmatprep.subr.mxu0 0.0
    %327 = vmatpush1.xpose.msra.mxu0 0.0
    %328 = vmatprep.subr.mxu0 0.0
    %329 = vmatpush1.xpose.msra.mxu0 0.0
    %330 = vmatprep.subr.mxu0 0.0
    %331 = vmatpush1.xpose.msra.mxu0 0.0
    %332 = vmatprep.subr.mxu0 0.0
    %333 = vmatpush1.xpose.msra.mxu0 0.0
    %334 = vmatprep.subr.mxu0 0.0
    %335 = vmatpush1.xpose.msra.mxu0 0.0
    %336 = vmatprep.subr.mxu0 0.0
    %337 = vmatpush1.xpose.msra.mxu0 0.0
    %338 = vmatprep.subr.mxu0 0.0
    %339 = vmatpush1.xpose.msra.mxu0 0.0
    %340 = vmatprep.mubr.f32.mxu0 %v57
    %341 = vmatmul.mubr.f32.gmra.mrb[0].mxu0 %v55
    %v342 = vpop.f32.mrb[0].mxu0
    %v343 = vadd.f32 %v273, %v342
    %v344 = vpop.f32.mrb[0].mxu0
    %345 = vdwg.mxu0
    %v346 = vadd.f32 %v21, %v343
    %vm347 = vcmask 9216
    %348 = vst.msk [vmem:[#allocation2] sm:$0x3] %vm347, %v346
    %v349 = vld [vmem:[%s1] sm:$0xff]
    %v350 = vld [vmem:[%s1 + $0x8] sm:$0xff]
    %v351 = vld [vmem:[#allocation3] sm:$0x3]
    %v354 = vcombine.high %v349, %v349
    %v356 = vunpack.c.l.s4 1983009808
    %v357 = vunpack.c.0.s8 %v356
    %v358 = vlaneseq
    %v359 = vshrl.u32 %v358, 7
    %v360 = vsub.s32 %v357, %v359
    %v361 = vrot.slane %v349, %v360
    %v363 = vunpack.c.l.s4 1983009808
    %v364 = vunpack.c.0.s8 %v363
    %v365 = vlaneseq
    %v366 = vshrl.u32 %v365, 7
    %v367 = vsub.s32 %v364, %v366
    %v368 = vrot.slane %v354, %v367
    %v369 = vcombine.high %v361, %v361
    %v370 = vcombine.high %v368, %v368
    %v371 = vcombine.high %v350, %v350
    %v373 = vunpack.c.l.s4 1983009808
    %v374 = vunpack.c.0.s8 %v373
    %v375 = vlaneseq
    %v376 = vshrl.u32 %v375, 7
    %v377 = vsub.s32 %v374, %v376
    %v378 = vrot.slane %v350, %v377
    %v380 = vunpack.c.l.s4 1983009808
    %v381 = vunpack.c.0.s8 %v380
    %v382 = vlaneseq
    %v383 = vshrl.u32 %v382, 7
    %v384 = vsub.s32 %v381, %v383
    %v385 = vrot.slane %v371, %v384
    %v386 = vcombine.high %v378, %v378
    %v387 = vcombine.high %v385, %v385
    %396 = vmatprep.subr.mxu0 %v369
    %397 = vmatpush1.xpose.msra.mxu0 %v361
    %398 = vmatprep.subr.mxu0 0.0
    %399 = vmatpush1.xpose.msra.mxu0 0.0
    %400 = vmatprep.subr.mxu0 0.0
    %401 = vmatpush1.xpose.msra.mxu0 0.0
    %402 = vmatprep.subr.mxu0 0.0
    %403 = vmatpush1.xpose.msra.mxu0 0.0
    %404 = vmatprep.subr.mxu0 0.0
    %405 = vmatpush1.xpose.msra.mxu0 0.0
    %406 = vmatprep.subr.mxu0 0.0
    %407 = vmatpush1.xpose.msra.mxu0 0.0
    %408 = vmatprep.subr.mxu0 0.0
    %409 = vmatpush1.xpose.msra.mxu0 0.0
    %410 = vmatprep.subr.mxu0 0.0
    %411 = vmatpush1.xpose.msra.mxu0 0.0
    %412 = vmatprep.subr.mxu0 0.0
    %413 = vmatpush1.xpose.msra.mxu0 0.0
    %414 = vmatprep.subr.mxu0 0.0
    %415 = vmatpush1.xpose.msra.mxu0 0.0
    %416 = vmatprep.subr.mxu0 0.0
    %417 = vmatpush1.xpose.msra.mxu0 0.0
    %418 = vmatprep.subr.mxu0 0.0
    %419 = vmatpush1.xpose.msra.mxu0 0.0
    %420 = vmatprep.subr.mxu0 0.0
    %421 = vmatpush1.xpose.msra.mxu0 0.0
    %422 = vmatprep.subr.mxu0 0.0
    %423 = vmatpush1.xpose.msra.mxu0 0.0
    %424 = vmatprep.subr.mxu0 0.0
    %425 = vmatpush1.xpose.msra.mxu0 0.0
    %426 = vmatprep.subr.mxu0 0.0
    %427 = vmatpush1.xpose.msra.mxu0 0.0
    %428 = vmatprep.subr.mxu0 0.0
    %429 = vmatpush1.xpose.msra.mxu0 0.0
    %430 = vmatprep.subr.mxu0 0.0
    %431 = vmatpush1.xpose.msra.mxu0 0.0
    %432 = vmatprep.subr.mxu0 0.0
    %433 = vmatpush1.xpose.msra.mxu0 0.0
    %434 = vmatprep.subr.mxu0 0.0
    %435 = vmatpush1.xpose.msra.mxu0 0.0
    %436 = vmatprep.subr.mxu0 0.0
    %437 = vmatpush1.xpose.msra.mxu0 0.0
    %438 = vmatprep.subr.mxu0 0.0
    %439 = vmatpush1.xpose.msra.mxu0 0.0
    %440 = vmatprep.subr.mxu0 0.0
    %441 = vmatpush1.xpose.msra.mxu0 0.0
    %442 = vmatprep.subr.mxu0 0.0
    %443 = vmatpush1.xpose.msra.mxu0 0.0
    %444 = vmatprep.subr.mxu0 0.0
    %445 = vmatpush1.xpose.msra.mxu0 0.0
    %446 = vmatprep.subr.mxu0 0.0
    %447 = vmatpush1.xpose.msra.mxu0 0.0
    %448 = vmatprep.subr.mxu0 0.0
    %449 = vmatpush1.xpose.msra.mxu0 0.0
    %450 = vmatprep.subr.mxu0 0.0
    %451 = vmatpush1.xpose.msra.mxu0 0.0
    %452 = vmatprep.subr.mxu0 0.0
    %453 = vmatpush1.xpose.msra.mxu0 0.0
    %454 = vmatprep.subr.mxu0 0.0
    %455 = vmatpush1.xpose.msra.mxu0 0.0
    %456 = vmatprep.subr.mxu0 0.0
    %457 = vmatpush1.xpose.msra.mxu0 0.0
    %458 = vmatprep.subr.mxu0 0.0
    %459 = vmatpush1.xpose.msra.mxu0 0.0
    %460 = vmatprep.mubr.f32.mxu0 %v369
    %461 = vmatmul.mubr.f32.gmra.mrb[0].mxu0 %v361
    %v462 = vpop.f32.mrb[0].mxu0
    %v463 = vadd.f32 0.0, %v462
    %v464 = vpop.f32.mrb[0].mxu0
    %465 = vdwg.mxu0
    %466 = vmatprep.subr.mxu0 %v370
    %467 = vmatpush1.xpose.msra.mxu0 %v368
    %468 = vmatprep.subr.mxu0 0.0
    %469 = vmatpush1.xpose.msra.mxu0 0.0
    %470 = vmatprep.subr.mxu0 0.0
    %471 = vmatpush1.xpose.msra.mxu0 0.0
    %472 = vmatprep.subr.mxu0 0.0
    %473 = vmatpush1.xpose.msra.mxu0 0.0
    %474 = vmatprep.subr.mxu0 0.0
    %475 = vmatpush1.xpose.msra.mxu0 0.0
    %476 = vmatprep.subr.mxu0 0.0
    %477 = vmatpush1.xpose.msra.mxu0 0.0
    %478 = vmatprep.subr.mxu0 0.0
    %479 = vmatpush1.xpose.msra.mxu0 0.0
    %480 = vmatprep.subr.mxu0 0.0
    %481 = vmatpush1.xpose.msra.mxu0 0.0
    %482 = vmatprep.subr.mxu0 0.0
    %483 = vmatpush1.xpose.msra.mxu0 0.0
    %484 = vmatprep.subr.mxu0 0.0
    %485 = vmatpush1.xpose.msra.mxu0 0.0
    %486 = vmatprep.subr.mxu0 0.0
    %487 = vmatpush1.xpose.msra.mxu0 0.0
    %488 = vmatprep.subr.mxu0 0.0
    %489 = vmatpush1.xpose.msra.mxu0 0.0
    %490 = vmatprep.subr.mxu0 0.0
    %491 = vmatpush1.xpose.msra.mxu0 0.0
    %492 = vmatprep.subr.mxu0 0.0
    %493 = vmatpush1.xpose.msra.mxu0 0.0
    %494 = vmatprep.subr.mxu0 0.0
    %495 = vmatpush1.xpose.msra.mxu0 0.0
    %496 = vmatprep.subr.mxu0 0.0
    %497 = vmatpush1.xpose.msra.mxu0 0.0
    %498 = vmatprep.subr.mxu0 0.0
    %499 = vmatpush1.xpose.msra.mxu0 0.0
    %500 = vmatprep.subr.mxu0 0.0
    %501 = vmatpush1.xpose.msra.mxu0 0.0
    %502 = vmatprep.subr.mxu0 0.0
    %503 = vmatpush1.xpose.msra.mxu0 0.0
    %504 = vmatprep.subr.mxu0 0.0
    %505 = vmatpush1.xpose.msra.mxu0 0.0
    %506 = vmatprep.subr.mxu0 0.0
    %507 = vmatpush1.xpose.msra.mxu0 0.0
    %508 = vmatprep.subr.mxu0 0.0
    %509 = vmatpush1.xpose.msra.mxu0 0.0
    %510 = vmatprep.subr.mxu0 0.0
    %511 = vmatpush1.xpose.msra.mxu0 0.0
    %512 = vmatprep.subr.mxu0 0.0
    %513 = vmatpush1.xpose.msra.mxu0 0.0
    %514 = vmatprep.subr.mxu0 0.0
    %515 = vmatpush1.xpose.msra.mxu0 0.0
    %516 = vmatprep.subr.mxu0 0.0
    %517 = vmatpush1.xpose.msra.mxu0 0.0
    %518 = vmatprep.subr.mxu0 0.0
    %519 = vmatpush1.xpose.msra.mxu0 0.0
    %520 = vmatprep.subr.mxu0 0.0
    %521 = vmatpush1.xpose.msra.mxu0 0.0
    %522 = vmatprep.subr.mxu0 0.0
    %523 = vmatpush1.xpose.msra.mxu0 0.0
    %524 = vmatprep.subr.mxu0 0.0
    %525 = vmatpush1.xpose.msra.mxu0 0.0
    %526 = vmatprep.subr.mxu0 0.0
    %527 = vmatpush1.xpose.msra.mxu0 0.0
    %528 = vmatprep.subr.mxu0 0.0
    %529 = vmatpush1.xpose.msra.mxu0 0.0
    %530 = vmatprep.mubr.f32.mxu0 %v370
    %531 = vmatmul.mubr.f32.gmra.mrb[0].mxu0 %v368
    %v532 = vpop.f32.mrb[0].mxu0
    %v533 = vadd.f32 %v463, %v532
    %v534 = vpop.f32.mrb[0].mxu0
    %535 = vdwg.mxu0
    %536 = vmatprep.subr.mxu0 %v386
    %537 = vmatpush1.xpose.msra.mxu0 %v378
    %538 = vmatprep.subr.mxu0 0.0
    %539 = vmatpush1.xpose.msra.mxu0 0.0
    %540 = vmatprep.subr.mxu0 0.0
    %541 = vmatpush1.xpose.msra.mxu0 0.0
    %542 = vmatprep.subr.mxu0 0.0
    %543 = vmatpush1.xpose.msra.mxu0 0.0
    %544 = vmatprep.subr.mxu0 0.0
    %545 = vmatpush1.xpose.msra.mxu0 0.0
    %546 = vmatprep.subr.mxu0 0.0
    %547 = vmatpush1.xpose.msra.mxu0 0.0
    %548 = vmatprep.subr.mxu0 0.0
    %549 = vmatpush1.xpose.msra.mxu0 0.0
    %550 = vmatprep.subr.mxu0 0.0
    %551 = vmatpush1.xpose.msra.mxu0 0.0
    %552 = vmatprep.subr.mxu0 0.0
    %553 = vmatpush1.xpose.msra.mxu0 0.0
    %554 = vmatprep.subr.mxu0 0.0
    %555 = vmatpush1.xpose.msra.mxu0 0.0
    %556 = vmatprep.subr.mxu0 0.0
    %557 = vmatpush1.xpose.msra.mxu0 0.0
    %558 = vmatprep.subr.mxu0 0.0
    %559 = vmatpush1.xpose.msra.mxu0 0.0
    %560 = vmatprep.subr.mxu0 0.0
    %561 = vmatpush1.xpose.msra.mxu0 0.0
    %562 = vmatprep.subr.mxu0 0.0
    %563 = vmatpush1.xpose.msra.mxu0 0.0
    %564 = vmatprep.subr.mxu0 0.0
    %565 = vmatpush1.xpose.msra.mxu0 0.0
    %566 = vmatprep.subr.mxu0 0.0
    %567 = vmatpush1.xpose.msra.mxu0 0.0
    %568 = vmatprep.subr.mxu0 0.0
    %569 = vmatpush1.xpose.msra.mxu0 0.0
    %570 = vmatprep.subr.mxu0 0.0
    %571 = vmatpush1.xpose.msra.mxu0 0.0
    %572 = vmatprep.subr.mxu0 0.0
    %573 = vmatpush1.xpose.msra.mxu0 0.0
    %574 = vmatprep.subr.mxu0 0.0
    %575 = vmatpush1.xpose.msra.mxu0 0.0
    %576 = vmatprep.subr.mxu0 0.0
    %577 = vmatpush1.xpose.msra.mxu0 0.0
    %578 = vmatprep.subr.mxu0 0.0
    %579 = vmatpush1.xpose.msra.mxu0 0.0
    %580 = vmatprep.subr.mxu0 0.0
    %581 = vmatpush1.xpose.msra.mxu0 0.0
    %582 = vmatprep.subr.mxu0 0.0
    %583 = vmatpush1.xpose.msra.mxu0 0.0
    %584 = vmatprep.subr.mxu0 0.0
    %585 = vmatpush1.xpose.msra.mxu0 0.0
    %586 = vmatprep.subr.mxu0 0.0
    %587 = vmatpush1.xpose.msra.mxu0 0.0
    %588 = vmatprep.subr.mxu0 0.0
    %589 = vmatpush1.xpose.msra.mxu0 0.0
    %590 = vmatprep.subr.mxu0 0.0
    %591 = vmatpush1.xpose.msra.mxu0 0.0
    %592 = vmatprep.subr.mxu0 0.0
    %593 = vmatpush1.xpose.msra.mxu0 0.0
    %594 = vmatprep.subr.mxu0 0.0
    %595 = vmatpush1.xpose.msra.mxu0 0.0
    %596 = vmatprep.subr.mxu0 0.0
    %597 = vmatpush1.xpose.msra.mxu0 0.0
    %598 = vmatprep.subr.mxu0 0.0
    %599 = vmatpush1.xpose.msra.mxu0 0.0
    %600 = vmatprep.mubr.f32.mxu0 %v386
    %601 = vmatmul.mubr.f32.gmra.mrb[0].mxu0 %v378
    %v602 = vpop.f32.mrb[0].mxu0
    %v603 = vadd.f32 %v533, %v602
    %v604 = vpop.f32.mrb[0].mxu0
    %605 = vdwg.mxu0
    %606 = vmatprep.subr.mxu0 %v387
    %607 = vmatpush1.xpose.msra.mxu0 %v385
    %608 = vmatprep.subr.mxu0 0.0
    %609 = vmatpush1.xpose.msra.mxu0 0.0
    %610 = vmatprep.subr.mxu0 0.0
    %611 = vmatpush1.xpose.msra.mxu0 0.0
    %612 = vmatprep.subr.mxu0 0.0
    %613 = vmatpush1.xpose.msra.mxu0 0.0
    %614 = vmatprep.subr.mxu0 0.0
    %615 = vmatpush1.xpose.msra.mxu0 0.0
    %616 = vmatprep.subr.mxu0 0.0
    %617 = vmatpush1.xpose.msra.mxu0 0.0
    %618 = vmatprep.subr.mxu0 0.0
    %619 = vmatpush1.xpose.msra.mxu0 0.0
    %620 = vmatprep.subr.mxu0 0.0
    %621 = vmatpush1.xpose.msra.mxu0 0.0
    %622 = vmatprep.subr.mxu0 0.0
    %623 = vmatpush1.xpose.msra.mxu0 0.0
    %624 = vmatprep.subr.mxu0 0.0
    %625 = vmatpush1.xpose.msra.mxu0 0.0
    %626 = vmatprep.subr.mxu0 0.0
    %627 = vmatpush1.xpose.msra.mxu0 0.0
    %628 = vmatprep.subr.mxu0 0.0
    %629 = vmatpush1.xpose.msra.mxu0 0.0
    %630 = vmatprep.subr.mxu0 0.0
    %631 = vmatpush1.xpose.msra.mxu0 0.0
    %632 = vmatprep.subr.mxu0 0.0
    %633 = vmatpush1.xpose.msra.mxu0 0.0
    %634 = vmatprep.subr.mxu0 0.0
    %635 = vmatpush1.xpose.msra.mxu0 0.0
    %636 = vmatprep.subr.mxu0 0.0
    %637 = vmatpush1.xpose.msra.mxu0 0.0
    %638 = vmatprep.subr.mxu0 0.0
    %639 = vmatpush1.xpose.msra.mxu0 0.0
    %640 = vmatprep.subr.mxu0 0.0
    %641 = vmatpush1.xpose.msra.mxu0 0.0
    %642 = vmatprep.subr.mxu0 0.0
    %643 = vmatpush1.xpose.msra.mxu0 0.0
    %644 = vmatprep.subr.mxu0 0.0
    %645 = vmatpush1.xpose.msra.mxu0 0.0
    %646 = vmatprep.subr.mxu0 0.0
    %647 = vmatpush1.xpose.msra.mxu0 0.0
    %648 = vmatprep.subr.mxu0 0.0
    %649 = vmatpush1.xpose.msra.mxu0 0.0
    %650 = vmatprep.subr.mxu0 0.0
    %651 = vmatpush1.xpose.msra.mxu0 0.0
    %652 = vmatprep.subr.mxu0 0.0
    %653 = vmatpush1.xpose.msra.mxu0 0.0
    %654 = vmatprep.subr.mxu0 0.0
    %655 = vmatpush1.xpose.msra.mxu0 0.0
    %656 = vmatprep.subr.mxu0 0.0
    %657 = vmatpush1.xpose.msra.mxu0 0.0
    %658 = vmatprep.subr.mxu0 0.0
    %659 = vmatpush1.xpose.msra.mxu0 0.0
    %660 = vmatprep.subr.mxu0 0.0
    %661 = vmatpush1.xpose.msra.mxu0 0.0
    %662 = vmatprep.subr.mxu0 0.0
    %663 = vmatpush1.xpose.msra.mxu0 0.0
    %664 = vmatprep.subr.mxu0 0.0
    %665 = vmatpush1.xpose.msra.mxu0 0.0
    %666 = vmatprep.subr.mxu0 0.0
    %667 = vmatpush1.xpose.msra.mxu0 0.0
    %668 = vmatprep.subr.mxu0 0.0
    %669 = vmatpush1.xpose.msra.mxu0 0.0
    %670 = vmatprep.mubr.f32.mxu0 %v387
    %671 = vmatmul.mubr.f32.gmra.mrb[0].mxu0 %v385
    %v672 = vpop.f32.mrb[0].mxu0
    %v673 = vadd.f32 %v603, %v672
    %v674 = vpop.f32.mrb[0].mxu0
    %675 = vdwg.mxu0
    %v676 = vadd.f32 %v351, %v673
    %677 = vst.msk [vmem:[#allocation3] sm:$0x3] %vm347, %v676
    // Predicated region
    $region14: #{criterion_sp.1} parent=1 // pred_check
      %p678 = pneg %p12
    $region15: #{criterion_sp.1} parent=1 // pred_check_branch
      %680 = sbr.rel (%p678) target = $region17
    $region16: #{criterion_sp.1} parent=1 // pred_region
      %v681 = vld [vmem:[#allocation2] sm:$0x3]
      %v682 = vld [vmem:[#allocation3] sm:$0x3]
      %v683 = vmul.f32 %v681, %v681
      %v684 = vsel %vm347, %v683, 0.0
      %685 = vadd.xlane.f32.xlu0 %v684
      %v686 = vpop.xlane.xlu0 %685
      %v687 = vrsqrt.pop %v686
      %v688 = vmul.f32 %v686, %v687
      %vm689 = vcmp.eq.f32.partialorder %v686, inf
      %v690 = vsel %vm689, %v686, %v688
      %vm691 = vcmp.eq.f32.partialorder %v686, 0.0
      %v692 = vand.u32 %v686, 2147483648
      %v693 = vsel %vm691, %v692, %v690
      %v694 = vmul.f32 %v682, %v682
      %v695 = vsel %vm347, %v694, 0.0
      %696 = vadd.xlane.f32.xlu0 %v695
      %v697 = vpop.xlane.xlu0 %696
      %v698 = vrsqrt.pop %v697
      %v699 = vmul.f32 %v697, %v698
      %vm700 = vcmp.eq.f32.partialorder %v697, inf
      %v701 = vsel %vm700, %v697, %v699
      %vm702 = vcmp.eq.f32.partialorder %v697, 0.0
      %v703 = vand.u32 %v697, 2147483648
      %v704 = vsel %vm702, %v703, %v701
      %v705 = vmax.f32 %v693, 1e-12
      %v706 = vrcp.pop %v705
      %v707 = vmul.f32 %v681, %v706
      %v708 = vmax.f32 %v704, 1e-12
      %v709 = vrcp.pop %v708
      %v710 = vmul.f32 %v682, %v709
      %v711 = vsub.f32 %v707, %v710
      %v712 = vmul.f32 %v711, %v711
      %v713 = vsel %vm347, %v712, 0.0
      %714 = vadd.xlane.f32.xlu0 %v713
      %v715 = vpop.xlane.xlu0 %714
      %v716 = vrot.slane %v715, 4
      %v717 = vadd.f32 %v715, %v716
      %v718 = vrot.slane %v717, 2
      %v719 = vadd.f32 %v717, %v718
      %v720 = vrot.slane %v719, 1
      %v721 = vadd.f32 %v719, %v720
      %s722 = vtos %v721
      %s723 = smul.f32 %s722, 0.25
      %s724 = scalar_lea.smem [#allocation4], 0
      %725 = sst [smem:[%s724]] %s723
    $region17: #{criterion_sp.1} parent=1 // pred_fallthru
      _
    // Predicated region
    $region18: #{criterion_sp.1} parent=1 // pred_check
      _
    $region19: #{criterion_sp.1} parent=1 // pred_check_branch
      %727 = sbr.rel (0) target = $region21
    $region20: #{criterion_sp.1} parent=1 // pred_region
      %s729 = ssub.s32 16, 16
      %730 = vsyncadd [#allocation5], %s729
      %733 = dma.smem_to_hbm [#allocation4], 16, %s2, [#allocation5]
    $region21: #{criterion_sp.1} parent=1 // pred_fallthru
      _
    // Predicated region
    $region22: #{criterion_sp.1} parent=1 // pred_check
      _
    $region23: #{criterion_sp.1} parent=1 // pred_check_branch
      %735 = sbr.rel (0) target = $region25
    $region24: #{criterion_sp.1} parent=1 // pred_region
      %736 = dma.done [#allocation5], 16
    $region25: #{criterion_sp.1} parent=1 // pred_fallthru
      _
    %737 = sfence
    %738 = vsyncpa [#allocation5], 1

</llo_original>
